<compile_context>
chip_gen: v7x
topology: tpu7x:2x2x1
jax: 0.10.0
libtpu: 0.0.40
codegen_flags: <defaults>
</compile_context>

<pallas_src>
import functools

import jax
import jax.numpy as jnp
from jax.experimental import pallas as pl
from jax.experimental.pallas import tpu as pltpu


def mlp_policy_kernel(x_ref, w1_ref, b1_ref, w2_ref, b2_ref, out_ref):
    # fc1: (TB, in) @ (in, H) on the MXU, f32 accumulation.
    h = jnp.dot(x_ref[...], w1_ref[...], preferred_element_type=jnp.float32)
    h = jnp.maximum(h + b1_ref[...], 0.0)          # bias + ReLU in f32 (VPU)

    # fc2: cast activation to the weight dtype (bf16) so the second matmul
    # also runs on the native bf16 MXU path; accumulate in f32.
    logits = jnp.dot(h.astype(w2_ref.dtype), w2_ref[...],
                     preferred_element_type=jnp.float32)
    logits = logits + b2_ref[...]                  # padded lanes get -1e30 here

    # Numerically stable softmax over the lane-dense (padded) last dim.
    # exp(-1e30 - m) == 0, so padded columns do not perturb the denominator.
    m = jnp.max(logits, axis=-1, keepdims=True)
    e = jnp.exp(logits - m)
    denom = jnp.sum(e, axis=-1, keepdims=True)
    out_ref[...] = (e * pl.reciprocal(denom, approx=True)).astype(out_ref.dtype)


@functools.partial(jax.jit, static_argnames=("block_b", "compute_dtype"))
def mlp_discrete_policy(x, w1_t, b1, w2_t, b2, *, block_b=512,
                        compute_dtype=jnp.bfloat16):
    """x: (B, input_dim); w1_t: (input_dim, hidden); b1: (1, hidden);
    w2_t: (hidden, output_dim); b2: (1, output_dim).  Returns (B, output_dim)
    f32 probabilities (rows sum to 1)."""
    B, input_dim = x.shape
    hidden_dim = w1_t.shape[1]
    out_dim = w2_t.shape[1]

    # ---- lane-dense output: pad action dim up to a multiple of 128 ---------
    o_pad = max(128, ((out_dim + 127) // 128) * 128)
    if o_pad != out_dim:
        w2_t = jnp.pad(w2_t, ((0, 0), (0, o_pad - out_dim)))
        # Huge negative bias in the padded columns -> exp() == 0 exactly.
        b2 = jnp.pad(b2, ((0, 0), (0, o_pad - out_dim)), constant_values=-1e30)

    # ---- halve HBM bytes / feed the MXU natively (bf16 on v6e/v7x) ---------
    x_c = x.astype(compute_dtype)
    w1_c = w1_t.astype(compute_dtype)
    w2_c = w2_t.astype(compute_dtype)
    b1_f = b1.astype(jnp.float32)
    b2_f = b2.astype(jnp.float32)

    # ---- batch tile: as large as the VMEM budget allows, 8-sublane aligned -
    # Per-tile VMEM is only ~TB*(input_dim*2 + o_pad*4) bytes + ~tens of KB of
    # weights, so TB up to 512-2048 fits comfortably under default limits.
    if B <= 8:
        tb = B
    else:
        tb = min(block_b, B)
        tb = max(8, (tb // 8) * 8)
    grid = (pl.cdiv(B, tb),)

    out_padded = pl.pallas_call(
        mlp_policy_kernel,
        out_shape=jax.ShapeDtypeStruct((B, o_pad), jnp.float32),
        grid=grid,
        in_specs=[
            pl.BlockSpec((tb, input_dim), lambda i: (i, 0)),        # x streams
            pl.BlockSpec((input_dim, hidden_dim), lambda i: (0, 0)),  # resident
            pl.BlockSpec((1, hidden_dim), lambda i: (0, 0)),          # resident
            pl.BlockSpec((hidden_dim, o_pad), lambda i: (0, 0)),      # resident
            pl.BlockSpec((1, o_pad), lambda i: (0, 0)),               # resident
        ],
        out_specs=pl.BlockSpec((tb, o_pad), lambda i: (i, 0)),
        compiler_params=pltpu.CompilerParams(
            dimension_semantics=("parallel",),    # batch tiles are independent
        ),
    )(x_c, w1_c, b1_f, w2_c, b2_f)

    # Slice back to the real action dimension.
    return out_padded[:, :out_dim]


def init_params(key, input_dim, output_dim, hidden_dim):
    """Deterministic init mimicking nn.Linear's uniform(-1/sqrt(fan_in)) ranges.
    Weights stored directly in the transposed (in, out) layout the kernel uses."""
    k1, k2, k3, k4 = jax.random.split(key, 4)
    bound1 = 1.0 / jnp.sqrt(input_dim)
    bound2 = 1.0 / jnp.sqrt(hidden_dim)
    w1_t = jax.random.uniform(k1, (input_dim, hidden_dim), jnp.float32,
                              -bound1, bound1)
    b1 = jax.random.uniform(k2, (1, hidden_dim), jnp.float32, -bound1, bound1)
    w2_t = jax.random.uniform(k3, (hidden_dim, output_dim), jnp.float32,
                              -bound2, bound2)
    b2 = jax.random.uniform(k4, (1, output_dim), jnp.float32, -bound2, bound2)
    return w1_t, b1, w2_t, b2


if __name__ == "__main__":
    # Small shapes consistent with the module's MLP forward; batch sized so the
    # kernel actually exercises the batch grid (2 tiles of 128 rows).
    batch = 256
    input_dim = 32
    hidden_dim = 128
    output_dim = 8

    key = jax.random.PRNGKey(0)
    kx, kp = jax.random.split(key)
    x = jax.random.normal(kx, (batch, input_dim), jnp.float32)
    w1_t, b1, w2_t, b2 = init_params(kp, input_dim, output_dim, hidden_dim)

    out = mlp_discrete_policy(x, w1_t, b1, w2_t, b2, block_b=128)
    out = jax.block_until_ready(out)
    assert out.shape == (batch, output_dim)

    # Reference 1: plain JAX with the same bf16-matmul / f32-accumulate math.
    cd = jnp.bfloat16
    h_ref = jnp.maximum(
        jnp.dot(x.astype(cd), w1_t.astype(cd),
                preferred_element_type=jnp.float32) + b1, 0.0)
    logits_ref = jnp.dot(h_ref.astype(cd), w2_t.astype(cd),
                         preferred_element_type=jnp.float32) + b2
    ref_bf16 = jax.nn.softmax(logits_ref, axis=-1)

    # Reference 2: pure f32 (the exact PyTorch semantics).
    ref_f32 = jax.nn.softmax(jnp.maximum(x @ w1_t + b1, 0.0) @ w2_t + b2,
                             axis=-1)

    assert jnp.allclose(out, ref_bf16, atol=3e-3), "mismatch vs bf16 reference"
    assert jnp.allclose(out, ref_f32, atol=3e-2), "mismatch vs f32 reference"
    assert jnp.allclose(jnp.sum(out, axis=-1), 1.0, atol=5e-3), "rows must sum to 1"

    print("KERNEL_OK")
</pallas_src>

<mosaic_0001>
module attributes {stable_mosaic.version = 11 : i64} {
  func.func @mlp_policy_kernel(%arg0: i32, %arg1: memref<128x32xbf16, #tpu.memory_space<vmem>>, %arg2: memref<32x128xbf16, #tpu.memory_space<vmem>>, %arg3: memref<1x128xf32, #tpu.memory_space<vmem>>, %arg4: memref<128x128xbf16, #tpu.memory_space<vmem>>, %arg5: memref<1x128xf32, #tpu.memory_space<vmem>>, %arg6: memref<128x128xf32, #tpu.memory_space<vmem>>) attributes {dimension_semantics = [#tpu.dimension_semantics<parallel>], iteration_bounds = array<i64: 2>, scalar_prefetch = 0 : i64, scratch_operands = 0 : i64, tpu.core_type = #tpu.core_type<tc>, window_params = [{transform_indices = @transform_0, window_bounds = array<i64: 128, 32>}, {pipeline_mode = #tpu.pipeline_mode<synchronous>, transform_indices = @transform_1, window_bounds = array<i64: 32, 128>}, {pipeline_mode = #tpu.pipeline_mode<synchronous>, transform_indices = @transform_2, window_bounds = array<i64: 1, 128>}, {pipeline_mode = #tpu.pipeline_mode<synchronous>, transform_indices = @transform_3, window_bounds = array<i64: 128, 128>}, {pipeline_mode = #tpu.pipeline_mode<synchronous>, transform_indices = @transform_4, window_bounds = array<i64: 1, 128>}, {transform_indices = @transform_5, window_bounds = array<i64: 128, 128>}]} {
    %c0 = arith.constant 0 : index
    %c0_0 = arith.constant 0 : index
    %0 = vector.load %arg1[%c0, %c0_0] : memref<128x32xbf16, #tpu.memory_space<vmem>>, vector<128x32xbf16>
    %c0_1 = arith.constant 0 : index
    %c0_2 = arith.constant 0 : index
    %1 = vector.load %arg2[%c0_1, %c0_2] : memref<32x128xbf16, #tpu.memory_space<vmem>>, vector<32x128xbf16>
    %cst = arith.constant dense<0.000000e+00> : vector<128x128xf32>
    %2 = tpu.matmul %0, %1, %cst {dimension_numbers = #tpu.dot_dimension_numbers<[1], [0], [0], [1], [0, 0, 1, 1], [], []>} : vector<128x32xbf16>, vector<32x128xbf16>, vector<128x128xf32> -> vector<128x128xf32>
    %c0_3 = arith.constant 0 : index
    %c0_4 = arith.constant 0 : index
    %3 = vector.load %arg3[%c0_3, %c0_4] : memref<1x128xf32, #tpu.memory_space<vmem>>, vector<1x128xf32>
    %4 = vector.broadcast %3 : vector<1x128xf32> to vector<128x128xf32>
    %5 = arith.addf %2, %4 : vector<128x128xf32>
    %cst_5 = arith.constant 0.000000e+00 : f32
    %6 = vector.broadcast %cst_5 : f32 to vector<128x128xf32>
    %7 = arith.maximumf %5, %6 : vector<128x128xf32>
    %8 = arith.truncf %7 : vector<128x128xf32> to vector<128x128xbf16>
    %c0_6 = arith.constant 0 : index
    %c0_7 = arith.constant 0 : index
    %9 = vector.load %arg4[%c0_6, %c0_7] : memref<128x128xbf16, #tpu.memory_space<vmem>>, vector<128x128xbf16>
    %cst_8 = arith.constant dense<0.000000e+00> : vector<128x128xf32>
    %10 = tpu.matmul %8, %9, %cst_8 {dimension_numbers = #tpu.dot_dimension_numbers<[1], [0], [0], [1], [0, 0, 1, 1], [], []>} : vector<128x128xbf16>, vector<128x128xbf16>, vector<128x128xf32> -> vector<128x128xf32>
    %c0_9 = arith.constant 0 : index
    %c0_10 = arith.constant 0 : index
    %11 = vector.load %arg5[%c0_9, %c0_10] : memref<1x128xf32, #tpu.memory_space<vmem>>, vector<1x128xf32>
    %12 = vector.broadcast %11 : vector<1x128xf32> to vector<128x128xf32>
    %13 = arith.addf %10, %12 : vector<128x128xf32>
    %cst_11 = arith.constant dense<0xFF800000> : vector<128xf32>
    %14 = vector.multi_reduction <maximumf>, %13, %cst_11 [1] : vector<128x128xf32> to vector<128xf32>
    %15 = vector.shape_cast %14 : vector<128xf32> to vector<128x1xf32>
    %16 = vector.broadcast %15 : vector<128x1xf32> to vector<128x128xf32>
    %17 = arith.subf %13, %16 : vector<128x128xf32>
    %18 = math.exp %17 : vector<128x128xf32>
    %cst_12 = arith.constant dense<0.000000e+00> : vector<128xf32>
    %19 = vector.multi_reduction <add>, %18, %cst_12 [1] : vector<128x128xf32> to vector<128xf32>
    %20 = vector.shape_cast %19 : vector<128xf32> to vector<128x1xf32>
    %21 = tpu.reciprocal %20 {approx = true} : vector<128x1xf32> -> vector<128x1xf32>
    %22 = vector.broadcast %21 : vector<128x1xf32> to vector<128x128xf32>
    %23 = arith.mulf %18, %22 : vector<128x128xf32>
    %c0_13 = arith.constant 0 : index
    %c0_14 = arith.constant 0 : index
    %24 = vector.load %arg6[%c0_13, %c0_14] : memref<128x128xf32, #tpu.memory_space<vmem>>, vector<128x128xf32>
    tpu.vector_store %arg6[%c0_13, %c0_14], %23 {strides = array<i32>} : memref<128x128xf32, #tpu.memory_space<vmem>>, vector<128x128xf32>,
    return
  }
  func.func @transform_0(%arg0: i32) -> (i32, i32) {
    %c0_i32 = arith.constant 0 : i32
    %c0_i32_0 = arith.constant 0 : i32
    return %arg0, %c0_i32 : i32, i32
  }
  func.func @transform_1(%arg0: i32) -> (i32, i32) {
    %c0_i32 = arith.constant 0 : i32
    %c0_i32_0 = arith.constant 0 : i32
    %c0_i32_1 = arith.constant 0 : i32
    return %c0_i32, %c0_i32_0 : i32, i32
  }
  func.func @transform_2(%arg0: i32) -> (i32, i32) {
    %c0_i32 = arith.constant 0 : i32
    %c0_i32_0 = arith.constant 0 : i32
    %c0_i32_1 = arith.constant 0 : i32
    return %c0_i32, %c0_i32_0 : i32, i32
  }
  func.func @transform_3(%arg0: i32) -> (i32, i32) {
    %c0_i32 = arith.constant 0 : i32
    %c0_i32_0 = arith.constant 0 : i32
    %c0_i32_1 = arith.constant 0 : i32
    return %c0_i32, %c0_i32_0 : i32, i32
  }
  func.func @transform_4(%arg0: i32) -> (i32, i32) {
    %c0_i32 = arith.constant 0 : i32
    %c0_i32_0 = arith.constant 0 : i32
    %c0_i32_1 = arith.constant 0 : i32
    return %c0_i32, %c0_i32_0 : i32, i32
  }
  func.func @transform_5(%arg0: i32) -> (i32, i32) {
    %c0_i32 = arith.constant 0 : i32
    %c0_i32_0 = arith.constant 0 : i32
    return %arg0, %c0_i32 : i32, i32
  }
}

</mosaic_0001>

<llo_original>
// kernel: mlp_discrete_policy.1
$region0: #{mlp_discrete_policy.1}
  #allocation0 [shape = 'u32[]', space=smem, size = 0x4, offset = 0x4, fixed_abs, tag = 'smem constant byte address 0x4 - core index']
  #allocation1 [shape = 'u32[144,128]{1,0:T(1,128)}', space=vmem, size = 0x12000, scoped, tag = 'internal scratch']
  %s0 = inlined_call_operand.vmem [shape: bf16[256,32], index: 0, kind: input, shape index: {}]
  %s1 = inlined_call_operand.vmem [shape: bf16[32,128], index: 1, kind: input, shape index: {}]
  %s2 = inlined_call_operand.vmem [shape: f32[1,128], index: 2, kind: input, shape index: {}]
  %s3 = inlined_call_operand.vmem [shape: bf16[128,128], index: 3, kind: input, shape index: {}]
  %s4 = inlined_call_operand.vmem [shape: f32[1,128], index: 4, kind: input, shape index: {}]
  %s5 = inlined_call_operand.vmem [shape: f32[256,128], index: 5, kind: output, shape index: {}]
  %s6 = sld [smem:[#allocation0]]
  $region53: #{mlp_discrete_policy.1} parent=0
    _
  %s8 = ssub.s32 1, %s6
  %s9 = scalar_select 0, %s8, %s6
  loop: start=0, step=1, limit=4
  $region2: #{mlp_discrete_policy.1} parent=0 // loop_pre_header
    _
  $region3: #{mlp_discrete_policy.1} parent=0 // loop_header
    %s11 = sphi 0, %s15
    %p12 = scmp.ge.s32.totalorder %s11, 4
    %s21 = sphi 0, %s23
    %s24 = sphi 0, %s21
    %s25 = sphi 0, %s24
    %s41 = sphi 0, %s25
    %s45 = sphi 0, %s45
    %s47 = sphi 0, %s45
    %s48 = sphi 0, %s47
    %s62 = sphi 0, %s48
    %s66 = sphi 0, %s66
    %s68 = sphi 0, %s66
    %s69 = sphi 0, %s68
    %s83 = sphi 0, %s69
    %s87 = sphi 0, %s87
    %s89 = sphi 0, %s87
    %s90 = sphi 0, %s89
    %s104 = sphi 0, %s90
    %s108 = sphi 0, %s108
    %s110 = sphi 0, %s108
    %s111 = sphi 0, %s110
    %s125 = sphi 0, %s111
    %s131 = sphi 0, %s133
    %s134 = sphi 0, %s131
    %s135 = sphi 0, %s134
    %s151 = sphi 0, %s135
  $region4: #{mlp_discrete_policy.1} parent=0 // loop_header_branch
    %14 = sbr.rel (%p12) target = $region8
  $region5: #{mlp_discrete_policy.1} parent=0 // loop_body
    %s16 = ssub.s32 %s11, 1
    %s17 = ssub.s32 %s11, 2
    %s18 = sadd.s32 %s11, 1
    %s19 = ssub.s32 %s11, %s18
    %p20 = scmp.eq.s32.totalorder %s19, 0
    %s22 = sadd.s32 %s21, 1
    %s23 = scalar_select %p20, %s21, %s22
    %p26 = pneg %p20
    %p27 = scmp.eq.s32.totalorder %s11, 1
    %p28 = por %p26, %p27
    %p29 = scmp.ne.s32.totalorder %s21, %s24
    %p30 = scmp.eq.s32.totalorder %s11, 0
    %p31 = por %p29, %p30
    %p32 = scmp.ne.s32.totalorder %s21, %s24
    %p33 = scmp.eq.s32.totalorder %s16, 1
    %p34 = por %p32, %p33
    %p35 = scmp.ne.s32.totalorder %s24, %s25
    %p36 = scmp.eq.s32.totalorder %s16, 0
    %p37 = por %p35, %p36
    %p38 = scmp.ne.s32.totalorder %s24, %s25
    %p39 = scmp.eq.s32.totalorder %s17, 1
    %p40 = por %p38, %p39
    %p42 = scmp.ne.s32.totalorder %s25, %s41
    %p43 = scmp.eq.s32.totalorder %s17, 0
    %p44 = por %p42, %p43
    %s46 = sadd.s32 %s45, 1
    %p49 = scmp.eq.s32.totalorder %s11, 1
    %p50 = scmp.ne.s32.totalorder %s45, %s47
    %p51 = scmp.eq.s32.totalorder %s11, 0
    %p52 = por %p50, %p51
    %p53 = scmp.ne.s32.totalorder %s45, %s47
    %p54 = scmp.eq.s32.totalorder %s16, 1
    %p55 = por %p53, %p54
    %p56 = scmp.ne.s32.totalorder %s47, %s48
    %p57 = scmp.eq.s32.totalorder %s16, 0
    %p58 = por %p56, %p57
    %p59 = scmp.ne.s32.totalorder %s47, %s48
    %p60 = scmp.eq.s32.totalorder %s17, 1
    %p61 = por %p59, %p60
    %p63 = scmp.ne.s32.totalorder %s48, %s62
    %p64 = scmp.eq.s32.totalorder %s17, 0
    %p65 = por %p63, %p64
    %s67 = sadd.s32 %s66, 1
    %p70 = scmp.eq.s32.totalorder %s11, 1
    %p71 = scmp.ne.s32.totalorder %s66, %s68
    %p72 = scmp.eq.s32.totalorder %s11, 0
    %p73 = por %p71, %p72
    %p74 = scmp.ne.s32.totalorder %s66, %s68
    %p75 = scmp.eq.s32.totalorder %s16, 1
    %p76 = por %p74, %p75
    %p77 = scmp.ne.s32.totalorder %s68, %s69
    %p78 = scmp.eq.s32.totalorder %s16, 0
    %p79 = por %p77, %p78
    %p80 = scmp.ne.s32.totalorder %s68, %s69
    %p81 = scmp.eq.s32.totalorder %s17, 1
    %p82 = por %p80, %p81
    %p84 = scmp.ne.s32.totalorder %s69, %s83
    %p85 = scmp.eq.s32.totalorder %s17, 0
    %p86 = por %p84, %p85
    %s88 = sadd.s32 %s87, 1
    %p91 = scmp.eq.s32.totalorder %s11, 1
    %p92 = scmp.ne.s32.totalorder %s87, %s89
    %p93 = scmp.eq.s32.totalorder %s11, 0
    %p94 = por %p92, %p93
    %p95 = scmp.ne.s32.totalorder %s87, %s89
    %p96 = scmp.eq.s32.totalorder %s16, 1
    %p97 = por %p95, %p96
    %p98 = scmp.ne.s32.totalorder %s89, %s90
    %p99 = scmp.eq.s32.totalorder %s16, 0
    %p100 = por %p98, %p99
    %p101 = scmp.ne.s32.totalorder %s89, %s90
    %p102 = scmp.eq.s32.totalorder %s17, 1
    %p103 = por %p101, %p102
    %p105 = scmp.ne.s32.totalorder %s90, %s104
    %p106 = scmp.eq.s32.totalorder %s17, 0
    %p107 = por %p105, %p106
    %s109 = sadd.s32 %s108, 1
    %p112 = scmp.eq.s32.totalorder %s11, 1
    %p113 = scmp.ne.s32.totalorder %s108, %s110
    %p114 = scmp.eq.s32.totalorder %s11, 0
    %p115 = por %p113, %p114
    %p116 = scmp.ne.s32.totalorder %s108, %s110
    %p117 = scmp.eq.s32.totalorder %s16, 1
    %p118 = por %p116, %p117
    %p119 = scmp.ne.s32.totalorder %s110, %s111
    %p120 = scmp.eq.s32.totalorder %s16, 0
    %p121 = por %p119, %p120
    %p122 = scmp.ne.s32.totalorder %s110, %s111
    %p123 = scmp.eq.s32.totalorder %s17, 1
    %p124 = por %p122, %p123
    %p126 = scmp.ne.s32.totalorder %s111, %s125
    %p127 = scmp.eq.s32.totalorder %s17, 0
    %p128 = por %p126, %p127
    %s129 = ssub.s32 %s11, %s18
    %p130 = scmp.eq.s32.totalorder %s129, 0
    %s132 = sadd.s32 %s131, 1
    %s133 = scalar_select %p130, %s131, %s132
    %p136 = pneg %p130
    %p137 = scmp.eq.s32.totalorder %s11, 1
    %p138 = por %p136, %p137
    %p139 = scmp.ne.s32.totalorder %s131, %s134
    %p140 = scmp.eq.s32.totalorder %s11, 0
    %p141 = por %p139, %p140
    %p142 = scmp.ne.s32.totalorder %s131, %s134
    %p143 = scmp.eq.s32.totalorder %s16, 1
    %p144 = por %p142, %p143
    %p145 = scmp.ne.s32.totalorder %s134, %s135
    %p146 = scmp.eq.s32.totalorder %s16, 0
    %p147 = por %p145, %p146
    %p148 = scmp.ne.s32.totalorder %s134, %s135
    %p149 = scmp.eq.s32.totalorder %s17, 1
    %p150 = por %p148, %p149
    %p152 = scmp.ne.s32.totalorder %s135, %s151
    %p153 = scmp.eq.s32.totalorder %s17, 0
    %p154 = por %p152, %p153
    %p155 = scmp.le.s32.totalorder 1, %s11
    %p156 = scmp.lt.s32.totalorder %s11, 3
    %p157 = pnand %p155, %p156
    %p158 = pneg %p157
    // Predicated region
    $region9: #{mlp_discrete_policy.1} parent=5 // pred_check
      _
    $region10: #{mlp_discrete_policy.1} parent=5 // pred_check_branch
      %160 = sbr.rel (%p157) target = $region12
    $region11: #{mlp_discrete_policy.1} parent=5 // pred_region
      %s161 = ssub.s32 %s11, 1
      // Predicated region
      $region13: #{mlp_discrete_policy.1} parent=11 // pred_check
        %p162 = pneg %p58
      $region14: #{mlp_discrete_policy.1} parent=11 // pred_check_branch
        %164 = sbr.rel (%p162) target = $region16
      $region15: #{mlp_discrete_policy.1} parent=11 // pred_region
        _
      $region16: #{mlp_discrete_policy.1} parent=11 // pred_fallthru
        _
      // Predicated region
      $region17: #{mlp_discrete_policy.1} parent=11 // pred_check
        %p165 = pneg %p79
      $region18: #{mlp_discrete_policy.1} parent=11 // pred_check_branch
        %167 = sbr.rel (%p165) target = $region20
      $region19: #{mlp_discrete_policy.1} parent=11 // pred_region
        _
      $region20: #{mlp_discrete_policy.1} parent=11 // pred_fallthru
        _
      // Predicated region
      $region21: #{mlp_discrete_policy.1} parent=11 // pred_check
        %p168 = pneg %p100
      $region22: #{mlp_discrete_policy.1} parent=11 // pred_check_branch
        %170 = sbr.rel (%p168) target = $region24
      $region23: #{mlp_discrete_policy.1} parent=11 // pred_region
        _
      $region24: #{mlp_discrete_policy.1} parent=11 // pred_fallthru
        _
      // Predicated region
      $region25: #{mlp_discrete_policy.1} parent=11 // pred_check
        %p171 = pneg %p121
      $region26: #{mlp_discrete_policy.1} parent=11 // pred_check_branch
        %173 = sbr.rel (%p171) target = $region28
      $region27: #{mlp_discrete_policy.1} parent=11 // pred_region
        _
      $region28: #{mlp_discrete_policy.1} parent=11 // pred_fallthru
        _
    $region12: #{mlp_discrete_policy.1} parent=5 // pred_fallthru
      _
    %p174 = scmp.lt.s32.totalorder %s11, 2
    // Predicated region
    $region29: #{mlp_discrete_policy.1} parent=5 // pred_check
      %p175 = pneg %p174
    $region30: #{mlp_discrete_policy.1} parent=5 // pred_check_branch
      %177 = sbr.rel (%p175) target = $region32
    $region31: #{mlp_discrete_policy.1} parent=5 // pred_region
      // Predicated region
      $region33: #{mlp_discrete_policy.1} parent=31 // pred_check
        %p178 = pneg %p31
      $region34: #{mlp_discrete_policy.1} parent=31 // pred_check_branch
        %180 = sbr.rel (%p178) target = $region36
      $region35: #{mlp_discrete_policy.1} parent=31 // pred_region
        %s181 = smul.u32 16, %s11
        %p182 = scmp.lt.s32.totalorder %s181, 31
        %s183 = scalar_select %p182, %s181, 31
        %s184 = smul.addr %s183, 4
        %s185 = scalar_lea.vmem %s0, %s184
        %s186 = smul.u32 16, %s11
      $region36: #{mlp_discrete_policy.1} parent=31 // pred_fallthru
        _
    $region32: #{mlp_discrete_policy.1} parent=5 // pred_fallthru
      _
    %p187 = scmp.le.s32.totalorder 1, %s11
    %p188 = scmp.lt.s32.totalorder %s11, 3
    %p189 = pnand %p187, %p188
    %p190 = pneg %p189
    // Predicated region
    $region37: #{mlp_discrete_policy.1} parent=5 // pred_check
      _
    $region38: #{mlp_discrete_policy.1} parent=5 // pred_check_branch
      %192 = sbr.rel (%p189) target = $region40
    $region39: #{mlp_discrete_policy.1} parent=5 // pred_region
      %s193 = ssub.s32 %s11, 1
      %s194 = smul.u32 16, %s16
      %p195 = scmp.lt.s32.totalorder %s194, 31
      %s196 = scalar_select %p195, %s194, 31
      %s197 = smul.addr %s196, 4
      %s198 = scalar_lea.vmem %s0, %s197
      %p199 = pneg %p37
      %p200 = pneg %p34
      %p201 = pneg %p58
      %p202 = pneg %p55
      %p203 = pneg %p79
      %p204 = pneg %p76
      %p205 = pneg %p100
      %p206 = pneg %p97
      %p207 = pneg %p121
      %p208 = pneg %p118
      %p209 = pneg %p147
      %p210 = pneg %p144
      %s211 = smul.u32 16, %s16
      %p212 = scmp.lt.s32.totalorder %s211, 31
      %s213 = scalar_select %p212, %s211, 31
      %s214 = smul.addr %s213, 8
      %s215 = scalar_lea.vmem %s5, %s214
      %s216 = smul.u32 16, %s16
      %p217 = scmp.lt.s32.totalorder %s216, 31
      %s218 = scalar_select %p217, %s216, 31
      %s219 = smul.addr %s218, 4
      %s220 = scalar_lea.vmem %s0, %s219
      %s221 = smul.u32 16, %s16
      %s222 = smul.u32 16, %s16
      %p223 = scmp.lt.s32.totalorder %s222, 31
      %s224 = scalar_select %p223, %s222, 31
      %s225 = smul.addr %s224, 8
      %s226 = scalar_lea.vmem %s5, %s225
      %s227 = smul.u32 16, %s16
      %v229 = vld [vmem:[%s220] sm:$0xf]
      %v230 = vld [vmem:[%s220 + $0x4] sm:$0xf]
      %v231 = vld [vmem:[%s220 + $0x8] sm:$0xf]
      %v232 = vld [vmem:[%s220 + $0xc] sm:$0xf]
      %v233 = vld [vmem:[%s220 + $0x10] sm:$0xf]
      %v234 = vld [vmem:[%s220 + $0x14] sm:$0xf]
      %v235 = vld [vmem:[%s220 + $0x18] sm:$0xf]
      %v236 = vld [vmem:[%s220 + $0x1c] sm:$0xf]
      %v237 = vld [vmem:[%s220 + $0x20] sm:$0xf]
      %v238 = vld [vmem:[%s220 + $0x24] sm:$0xf]
      %v239 = vld [vmem:[%s220 + $0x28] sm:$0xf]
      %v240 = vld [vmem:[%s220 + $0x2c] sm:$0xf]
      %v241 = vld [vmem:[%s220 + $0x30] sm:$0xf]
      %v242 = vld [vmem:[%s220 + $0x34] sm:$0xf]
      %v243 = vld [vmem:[%s220 + $0x38] sm:$0xf]
      %v244 = vld [vmem:[%s220 + $0x3c] sm:$0xf]
      %v245 = vld [vmem:[%s1] sm:$0xf]
      %v246 = vld [vmem:[%s1 + $0x4] sm:$0xf]
      %v247 = vld [vmem:[%s1 + $0x8] sm:$0xf]
      %v248 = vld [vmem:[%s1 + $0xc] sm:$0xf]
      %v249 = vld [vmem:[%s2] sm:$0x1]
      %v251 = vlaneseq
      %v252 = vshrl.u32 %v251, 7
      %v253 = vsub.s32 0, %v252
      %v254 = vrot.slane %v249, %v253
      %v272 = vunpack.c.l.b16 %v229
      %v273 = vunpack.c.l.b16 %v230
      %v274 = vunpack.c.l.b16 %v231
      %v275 = vunpack.c.l.b16 %v232
      %v276 = vunpack.c.l.b16 %v233
      %v277 = vunpack.c.l.b16 %v234
      %v278 = vunpack.c.l.b16 %v235
      %v279 = vunpack.c.l.b16 %v236
      %v280 = vunpack.c.l.b16 %v237
      %v281 = vunpack.c.l.b16 %v238
      %v282 = vunpack.c.l.b16 %v239
      %v283 = vunpack.c.l.b16 %v240
      %v284 = vunpack.c.l.b16 %v241
      %v285 = vunpack.c.l.b16 %v242
      %v286 = vunpack.c.l.b16 %v243
      %v287 = vunpack.c.l.b16 %v244
      %v288 = vpack.c.b16 %v273, %v272
      %v289 = vpack.c.b16 %v275, %v274
      %v290 = vpack.c.b16 %v277, %v276
      %v291 = vpack.c.b16 %v279, %v278
      %v292 = vpack.c.b16 %v281, %v280
      %v293 = vpack.c.b16 %v283, %v282
      %v294 = vpack.c.b16 %v285, %v284
      %v295 = vpack.c.b16 %v287, %v286
      %v300 = vunpack.c.l.b16 %v245
      %v301 = vunpack.c.l.b16 %v246
      %v302 = vunpack.c.l.b16 %v247
      %v303 = vunpack.c.l.b16 %v248
      %v304 = vpack.c.b16 %v301, %v300
      %v305 = vpack.c.b16 %v303, %v302
      %vm308 = vcmask 261120
      %v310 = vsel %vm308, %v288, 0
      %v313 = vsel %vm308, %v289, 0
      %v316 = vsel %vm308, %v290, 0
      %v319 = vsel %vm308, %v291, 0
      %v322 = vsel %vm308, %v292, 0
      %v325 = vsel %vm308, %v293, 0
      %v328 = vsel %vm308, %v294, 0
      %v331 = vsel %vm308, %v295, 0
      %333 = vmatprep.subr.bf16.mxu0 0
      %334 = vmatpush1.bf16.msra.mxu0 %v304
      %335 = vmatprep.subr.bf16.mxu0 0
      %336 = vmatpush1.bf16.msra.mxu0 %v305
      %337 = vmatprep.subr.bf16.mxu0 0
      %338 = vmatpush1.bf16.msra.mxu0 0
      %339 = vmatprep.subr.bf16.mxu0 0
      %340 = vmatpush1.bf16.msra.mxu0 0
      %341 = vmatprep.subr.bf16.mxu0 0
      %342 = vmatpush1.bf16.msra.mxu0 0
      %343 = vmatprep.subr.bf16.mxu0 0
      %344 = vmatpush1.bf16.msra.mxu0 0
      %345 = vmatprep.subr.bf16.mxu0 0
      %346 = vmatpush1.bf16.msra.mxu0 0
      %347 = vmatprep.subr.bf16.mxu0 0
      %348 = vmatpush1.bf16.msra.mxu0 0
      %349 = vmatprep.subr.bf16.mxu0 0
      %350 = vmatpush1.bf16.msra.mxu0 0
      %351 = vmatprep.subr.bf16.mxu0 0
      %352 = vmatpush1.bf16.msra.mxu0 0
      %353 = vmatprep.subr.bf16.mxu0 0
      %354 = vmatpush1.bf16.msra.mxu0 0
      %355 = vmatprep.subr.bf16.mxu0 0
      %356 = vmatpush1.bf16.msra.mxu0 0
      %357 = vmatprep.subr.bf16.mxu0 0
      %358 = vmatpush1.bf16.msra.mxu0 0
      %359 = vmatprep.subr.bf16.mxu0 0
      %360 = vmatpush1.bf16.msra.mxu0 0
      %361 = vmatprep.subr.bf16.mxu0 0
      %362 = vmatpush1.bf16.msra.mxu0 0
      %363 = vmatprep.subr.bf16.mxu0 0
      %364 = vmatpush1.bf16.msra.mxu0 0
      %365 = vmatprep.mubr.bf16.mxu0 0
      %366 = vmatmul.mubr.bf16.gmra.mrb[0].mxu0 %v310
      %v367 = vpop.f32.mrb[0].mxu0
      %v368 = vadd.f32 %v254, %v367
      %v369 = vpop.f32.mrb[0].mxu0
      %v370 = vpop.f32.mrb[0].mxu0
      %v371 = vadd.f32 %v254, %v370
      %v372 = vpop.f32.mrb[0].mxu0
      %373 = vmatprep.mubr.bf16.mxu0 0
      %374 = vmatmul.mubr.bf16.gmra.mrb[0].mxu0 %v313
      %v375 = vpop.f32.mrb[0].mxu0
      %v376 = vadd.f32 %v254, %v375
      %v377 = vpop.f32.mrb[0].mxu0
      %v378 = vpop.f32.mrb[0].mxu0
      %v379 = vadd.f32 %v254, %v378
      %v380 = vpop.f32.mrb[0].mxu0
      %381 = vmatprep.mubr.bf16.mxu0 0
      %382 = vmatmul.mubr.bf16.gmra.mrb[0].mxu0 %v316
      %v383 = vpop.f32.mrb[0].mxu0
      %v384 = vadd.f32 %v254, %v383
      %v385 = vpop.f32.mrb[0].mxu0
      %v386 = vpop.f32.mrb[0].mxu0
      %v387 = vadd.f32 %v254, %v386
      %v388 = vpop.f32.mrb[0].mxu0
      %389 = vmatprep.mubr.bf16.mxu0 0
      %390 = vmatmul.mubr.bf16.gmra.mrb[0].mxu0 %v319
      %v391 = vpop.f32.mrb[0].mxu0
      %v392 = vadd.f32 %v254, %v391
      %v393 = vpop.f32.mrb[0].mxu0
      %v394 = vpop.f32.mrb[0].mxu0
      %v395 = vadd.f32 %v254, %v394
      %v396 = vpop.f32.mrb[0].mxu0
      %397 = vmatprep.mubr.bf16.mxu0 0
      %398 = vmatmul.mubr.bf16.gmra.mrb[0].mxu0 %v322
      %v399 = vpop.f32.mrb[0].mxu0
      %v400 = vadd.f32 %v254, %v399
      %v401 = vpop.f32.mrb[0].mxu0
      %v402 = vpop.f32.mrb[0].mxu0
      %v403 = vadd.f32 %v254, %v402
      %v404 = vpop.f32.mrb[0].mxu0
      %405 = vmatprep.mubr.bf16.mxu0 0
      %406 = vmatmul.mubr.bf16.gmra.mrb[0].mxu0 %v325
      %v407 = vpop.f32.mrb[0].mxu0
      %v408 = vadd.f32 %v254, %v407
      %v409 = vpop.f32.mrb[0].mxu0
      %v410 = vpop.f32.mrb[0].mxu0
      %v411 = vadd.f32 %v254, %v410
      %v412 = vpop.f32.mrb[0].mxu0
      %413 = vmatprep.mubr.bf16.mxu0 0
      %414 = vmatmul.mubr.bf16.gmra.mrb[0].mxu0 %v328
      %v415 = vpop.f32.mrb[0].mxu0
      %v416 = vadd.f32 %v254, %v415
      %v417 = vpop.f32.mrb[0].mxu0
      %v418 = vpop.f32.mrb[0].mxu0
      %v419 = vadd.f32 %v254, %v418
      %v420 = vpop.f32.mrb[0].mxu0
      %421 = vmatprep.mubr.bf16.mxu0 0
      %422 = vmatmul.mubr.bf16.gmra.mrb[0].mxu0 %v331
      %v423 = vpop.f32.mrb[0].mxu0
      %v424 = vadd.f32 %v254, %v423
      %v425 = vpop.f32.mrb[0].mxu0
      %v426 = vpop.f32.mrb[0].mxu0
      %v427 = vadd.f32 %v254, %v426
      %v428 = vpop.f32.mrb[0].mxu0
      %429 = vdwg.mxu0
      %v430 = vmax.f32 %v368, 0.0
      %v431 = vmax.f32 %v371, 0.0
      %v432 = vmax.f32 %v376, 0.0
      %v433 = vmax.f32 %v379, 0.0
      %v434 = vmax.f32 %v384, 0.0
      %v435 = vmax.f32 %v387, 0.0
      %v436 = vmax.f32 %v392, 0.0
      %v437 = vmax.f32 %v395, 0.0
      %v438 = vmax.f32 %v400, 0.0
      %v439 = vmax.f32 %v403, 0.0
      %v440 = vmax.f32 %v408, 0.0
      %v441 = vmax.f32 %v411, 0.0
      %v442 = vmax.f32 %v416, 0.0
      %v443 = vmax.f32 %v419, 0.0
      %v444 = vmax.f32 %v424, 0.0
      %v445 = vmax.f32 %v427, 0.0
      %v446 = vpack.c.bf16 %v431, %v430
      %v447 = vpack.c.bf16 %v433, %v432
      %v448 = vpack.c.bf16 %v435, %v434
      %v449 = vpack.c.bf16 %v437, %v436
      %v450 = vpack.c.bf16 %v439, %v438
      %v451 = vpack.c.bf16 %v441, %v440
      %v452 = vpack.c.bf16 %v443, %v442
      %v453 = vpack.c.bf16 %v445, %v444
      %v454 = vld [vmem:[%s3] sm:$0xf]
      %v455 = vld [vmem:[%s3 + $0x4] sm:$0xf]
      %v456 = vld [vmem:[%s3 + $0x8] sm:$0xf]
      %v457 = vld [vmem:[%s3 + $0xc] sm:$0xf]
      %v458 = vld [vmem:[%s3 + $0x10] sm:$0xf]
      %v459 = vld [vmem:[%s3 + $0x14] sm:$0xf]
      %v460 = vld [vmem:[%s3 + $0x18] sm:$0xf]
      %v461 = vld [vmem:[%s3 + $0x1c] sm:$0xf]
      %v462 = vld [vmem:[%s3 + $0x20] sm:$0xf]
      %v463 = vld [vmem:[%s3 + $0x24] sm:$0xf]
      %v464 = vld [vmem:[%s3 + $0x28] sm:$0xf]
      %v465 = vld [vmem:[%s3 + $0x2c] sm:$0xf]
      %v466 = vld [vmem:[%s3 + $0x30] sm:$0xf]
      %v467 = vld [vmem:[%s3 + $0x34] sm:$0xf]
      %v468 = vld [vmem:[%s3 + $0x38] sm:$0xf]
      %v469 = vld [vmem:[%s3 + $0x3c] sm:$0xf]
      %v470 = vld [vmem:[%s4] sm:$0x1]
      %v472 = vlaneseq
      %v473 = vshrl.u32 %v472, 7
      %v474 = vsub.s32 0, %v473
      %v475 = vrot.slane %v470, %v474
      %v493 = vunpack.c.l.b16 %v454
      %v494 = vunpack.c.l.b16 %v455
      %v495 = vunpack.c.l.b16 %v456
      %v496 = vunpack.c.l.b16 %v457
      %v497 = vunpack.c.l.b16 %v458
      %v498 = vunpack.c.l.b16 %v459
      %v499 = vunpack.c.l.b16 %v460
      %v500 = vunpack.c.l.b16 %v461
      %v501 = vunpack.c.l.b16 %v462
      %v502 = vunpack.c.l.b16 %v463
      %v503 = vunpack.c.l.b16 %v464
      %v504 = vunpack.c.l.b16 %v465
      %v505 = vunpack.c.l.b16 %v466
      %v506 = vunpack.c.l.b16 %v467
      %v507 = vunpack.c.l.b16 %v468
      %v508 = vunpack.c.l.b16 %v469
      %v509 = vpack.c.b16 %v494, %v493
      %v510 = vpack.c.b16 %v496, %v495
      %v511 = vpack.c.b16 %v498, %v497
      %v512 = vpack.c.b16 %v500, %v499
      %v513 = vpack.c.b16 %v502, %v501
      %v514 = vpack.c.b16 %v504, %v503
      %v515 = vpack.c.b16 %v506, %v505
      %v516 = vpack.c.b16 %v508, %v507
      %525 = vmatprep.subr.bf16.mxu0 0
      %526 = vmatpush1.bf16.msra.mxu0 %v509
      %527 = vmatprep.subr.bf16.mxu0 0
      %528 = vmatpush1.bf16.msra.mxu0 %v510
      %529 = vmatprep.subr.bf16.mxu0 0
      %530 = vmatpush1.bf16.msra.mxu0 %v511
      %531 = vmatprep.subr.bf16.mxu0 0
      %532 = vmatpush1.bf16.msra.mxu0 %v512
      %533 = vmatprep.subr.bf16.mxu0 0
      %534 = vmatpush1.bf16.msra.mxu0 %v513
      %535 = vmatprep.subr.bf16.mxu0 0
      %536 = vmatpush1.bf16.msra.mxu0 %v514
      %537 = vmatprep.subr.bf16.mxu0 0
      %538 = vmatpush1.bf16.msra.mxu0 %v515
      %539 = vmatprep.subr.bf16.mxu0 0
      %540 = vmatpush1.bf16.msra.mxu0 %v516
      %541 = vmatprep.subr.bf16.mxu0 0
      %542 = vmatpush1.bf16.msra.mxu0 0
      %543 = vmatprep.subr.bf16.mxu0 0
      %544 = vmatpush1.bf16.msra.mxu0 0
      %545 = vmatprep.subr.bf16.mxu0 0
      %546 = vmatpush1.bf16.msra.mxu0 0
      %547 = vmatprep.subr.bf16.mxu0 0
      %548 = vmatpush1.bf16.msra.mxu0 0
      %549 = vmatprep.subr.bf16.mxu0 0
      %550 = vmatpush1.bf16.msra.mxu0 0
      %551 = vmatprep.subr.bf16.mxu0 0
      %552 = vmatpush1.bf16.msra.mxu0 0
      %553 = vmatprep.subr.bf16.mxu0 0
      %554 = vmatpush1.bf16.msra.mxu0 0
      %555 = vmatprep.subr.bf16.mxu0 0
      %556 = vmatpush1.bf16.msra.mxu0 0
      %557 = vmatprep.mubr.bf16.mxu0 0
      %558 = vmatmul.mubr.bf16.gmra.mrb[0].mxu0 %v446
      %v559 = vpop.f32.mrb[0].mxu0
      %v560 = vadd.f32 %v475, %v559
      %v561 = vpop.f32.mrb[0].mxu0
      %v562 = vpop.f32.mrb[0].mxu0
      %v563 = vadd.f32 %v475, %v562
      %v564 = vpop.f32.mrb[0].mxu0
      %565 = vmatprep.mubr.bf16.mxu0 0
      %566 = vmatmul.mubr.bf16.gmra.mrb[0].mxu0 %v447
      %v567 = vpop.f32.mrb[0].mxu0
      %v568 = vadd.f32 %v475, %v567
      %v569 = vpop.f32.mrb[0].mxu0
      %v570 = vpop.f32.mrb[0].mxu0
      %v571 = vadd.f32 %v475, %v570
      %v572 = vpop.f32.mrb[0].mxu0
      %573 = vmatprep.mubr.bf16.mxu0 0
      %574 = vmatmul.mubr.bf16.gmra.mrb[0].mxu0 %v448
      %v575 = vpop.f32.mrb[0].mxu0
      %v576 = vadd.f32 %v475, %v575
      %v577 = vpop.f32.mrb[0].mxu0
      %v578 = vpop.f32.mrb[0].mxu0
      %v579 = vadd.f32 %v475, %v578
      %v580 = vpop.f32.mrb[0].mxu0
      %581 = vmatprep.mubr.bf16.mxu0 0
      %582 = vmatmul.mubr.bf16.gmra.mrb[0].mxu0 %v449
      %v583 = vpop.f32.mrb[0].mxu0
      %v584 = vadd.f32 %v475, %v583
      %v585 = vpop.f32.mrb[0].mxu0
      %v586 = vpop.f32.mrb[0].mxu0
      %v587 = vadd.f32 %v475, %v586
      %v588 = vpop.f32.mrb[0].mxu0
      %589 = vmatprep.mubr.bf16.mxu0 0
      %590 = vmatmul.mubr.bf16.gmra.mrb[0].mxu0 %v450
      %v591 = vpop.f32.mrb[0].mxu0
      %v592 = vadd.f32 %v475, %v591
      %v593 = vpop.f32.mrb[0].mxu0
      %v594 = vpop.f32.mrb[0].mxu0
      %v595 = vadd.f32 %v475, %v594
      %v596 = vpop.f32.mrb[0].mxu0
      %597 = vmatprep.mubr.bf16.mxu0 0
      %598 = vmatmul.mubr.bf16.gmra.mrb[0].mxu0 %v451
      %v599 = vpop.f32.mrb[0].mxu0
      %v600 = vadd.f32 %v475, %v599
      %v601 = vpop.f32.mrb[0].mxu0
      %v602 = vpop.f32.mrb[0].mxu0
      %v603 = vadd.f32 %v475, %v602
      %v604 = vpop.f32.mrb[0].mxu0
      %605 = vmatprep.mubr.bf16.mxu0 0
      %606 = vmatmul.mubr.bf16.gmra.mrb[0].mxu0 %v452
      %v607 = vpop.f32.mrb[0].mxu0
      %v608 = vadd.f32 %v475, %v607
      %v609 = vpop.f32.mrb[0].mxu0
      %v610 = vpop.f32.mrb[0].mxu0
      %v611 = vadd.f32 %v475, %v610
      %v612 = vpop.f32.mrb[0].mxu0
      %613 = vmatprep.mubr.bf16.mxu0 0
      %614 = vmatmul.mubr.bf16.gmra.mrb[0].mxu0 %v453
      %v615 = vpop.f32.mrb[0].mxu0
      %v616 = vadd.f32 %v475, %v615
      %v617 = vpop.f32.mrb[0].mxu0
      %v618 = vpop.f32.mrb[0].mxu0
      %v619 = vadd.f32 %v475, %v618
      %v620 = vpop.f32.mrb[0].mxu0
      %621 = vdwg.mxu0
      %622 = vmax.xlane.f32.xlu0 %v560
      %v623 = vpop.xlane.xlu0 %622
      %624 = vmax.xlane.f32.xlu0 %v563
      %v625 = vpop.xlane.xlu0 %624
      %626 = vmax.xlane.f32.xlu0 %v568
      %v627 = vpop.xlane.xlu0 %626
      %628 = vmax.xlane.f32.xlu0 %v571
      %v629 = vpop.xlane.xlu0 %628
      %630 = vmax.xlane.f32.xlu0 %v576
      %v631 = vpop.xlane.xlu0 %630
      %632 = vmax.xlane.f32.xlu0 %v579
      %v633 = vpop.xlane.xlu0 %632
      %634 = vmax.xlane.f32.xlu0 %v584
      %v635 = vpop.xlane.xlu0 %634
      %636 = vmax.xlane.f32.xlu0 %v587
      %v637 = vpop.xlane.xlu0 %636
      %638 = vmax.xlane.f32.xlu0 %v592
      %v639 = vpop.xlane.xlu0 %638
      %640 = vmax.xlane.f32.xlu0 %v595
      %v641 = vpop.xlane.xlu0 %640
      %642 = vmax.xlane.f32.xlu0 %v600
      %v643 = vpop.xlane.xlu0 %642
      %644 = vmax.xlane.f32.xlu0 %v603
      %v645 = vpop.xlane.xlu0 %644
      %646 = vmax.xlane.f32.xlu0 %v608
      %v647 = vpop.xlane.xlu0 %646
      %648 = vmax.xlane.f32.xlu0 %v611
      %v649 = vpop.xlane.xlu0 %648
      %650 = vmax.xlane.f32.xlu0 %v616
      %v651 = vpop.xlane.xlu0 %650
      %652 = vmax.xlane.f32.xlu0 %v619
      %v653 = vpop.xlane.xlu0 %652
      %v654 = vsub.f32 %v560, %v623
      %v655 = vsub.f32 %v563, %v625
      %v656 = vsub.f32 %v568, %v627
      %v657 = vsub.f32 %v571, %v629
      %v658 = vsub.f32 %v576, %v631
      %v659 = vsub.f32 %v579, %v633
      %v660 = vsub.f32 %v584, %v635
      %v661 = vsub.f32 %v587, %v637
      %v662 = vsub.f32 %v592, %v639
      %v663 = vsub.f32 %v595, %v641
      %v664 = vsub.f32 %v600, %v643
      %v665 = vsub.f32 %v603, %v645
      %v666 = vsub.f32 %v608, %v647
      %v667 = vsub.f32 %v611, %v649
      %v668 = vsub.f32 %v616, %v651
      %v669 = vsub.f32 %v619, %v653
      %v670 = vmul.f32 %v654, 1.442695
      %v671 = vpow.pop %v670
      %v672 = vmul.f32 %v655, 1.442695
      %v673 = vpow.pop %v672
      %v674 = vmul.f32 %v656, 1.442695
      %v675 = vpow.pop %v674
      %v676 = vmul.f32 %v657, 1.442695
      %v677 = vpow.pop %v676
      %v678 = vmul.f32 %v658, 1.442695
      %v679 = vpow.pop %v678
      %v680 = vmul.f32 %v659, 1.442695
      %v681 = vpow.pop %v680
      %v682 = vmul.f32 %v660, 1.442695
      %v683 = vpow.pop %v682
      %v684 = vmul.f32 %v661, 1.442695
      %v685 = vpow.pop %v684
      %v686 = vmul.f32 %v662, 1.442695
      %v687 = vpow.pop %v686
      %v688 = vmul.f32 %v663, 1.442695
      %v689 = vpow.pop %v688
      %v690 = vmul.f32 %v664, 1.442695
      %v691 = vpow.pop %v690
      %v692 = vmul.f32 %v665, 1.442695
      %v693 = vpow.pop %v692
      %v694 = vmul.f32 %v666, 1.442695
      %v695 = vpow.pop %v694
      %v696 = vmul.f32 %v667, 1.442695
      %v697 = vpow.pop %v696
      %v698 = vmul.f32 %v668, 1.442695
      %v699 = vpow.pop %v698
      %v700 = vmul.f32 %v669, 1.442695
      %v701 = vpow.pop %v700
      %702 = vadd.xlane.f32.xlu0 %v671
      %v703 = vpop.xlane.xlu0 %702
      %704 = vadd.xlane.f32.xlu0 %v673
      %v705 = vpop.xlane.xlu0 %704
      %706 = vadd.xlane.f32.xlu0 %v675
      %v707 = vpop.xlane.xlu0 %706
      %708 = vadd.xlane.f32.xlu0 %v677
      %v709 = vpop.xlane.xlu0 %708
      %710 = vadd.xlane.f32.xlu0 %v679
      %v711 = vpop.xlane.xlu0 %710
      %712 = vadd.xlane.f32.xlu0 %v681
      %v713 = vpop.xlane.xlu0 %712
      %714 = vadd.xlane.f32.xlu0 %v683
      %v715 = vpop.xlane.xlu0 %714
      %716 = vadd.xlane.f32.xlu0 %v685
      %v717 = vpop.xlane.xlu0 %716
      %718 = vadd.xlane.f32.xlu0 %v687
      %v719 = vpop.xlane.xlu0 %718
      %720 = vadd.xlane.f32.xlu0 %v689
      %v721 = vpop.xlane.xlu0 %720
      %722 = vadd.xlane.f32.xlu0 %v691
      %v723 = vpop.xlane.xlu0 %722
      %724 = vadd.xlane.f32.xlu0 %v693
      %v725 = vpop.xlane.xlu0 %724
      %726 = vadd.xlane.f32.xlu0 %v695
      %v727 = vpop.xlane.xlu0 %726
      %728 = vadd.xlane.f32.xlu0 %v697
      %v729 = vpop.xlane.xlu0 %728
      %730 = vadd.xlane.f32.xlu0 %v699
      %v731 = vpop.xlane.xlu0 %730
      %732 = vadd.xlane.f32.xlu0 %v701
      %v733 = vpop.xlane.xlu0 %732
      %v734 = vrcp.pop %v703
      %v735 = vrcp.pop %v705
      %v736 = vrcp.pop %v707
      %v737 = vrcp.pop %v709
      %v738 = vrcp.pop %v711
      %v739 = vrcp.pop %v713
      %v740 = vrcp.pop %v715
      %v741 = vrcp.pop %v717
      %v742 = vrcp.pop %v719
      %v743 = vrcp.pop %v721
      %v744 = vrcp.pop %v723
      %v745 = vrcp.pop %v725
      %v746 = vrcp.pop %v727
      %v747 = vrcp.pop %v729
      %v748 = vrcp.pop %v731
      %v749 = vrcp.pop %v733
      %v750 = vmul.f32 %v671, %v734
      %v751 = vmul.f32 %v673, %v735
      %v752 = vmul.f32 %v675, %v736
      %v753 = vmul.f32 %v677, %v737
      %v754 = vmul.f32 %v679, %v738
      %v755 = vmul.f32 %v681, %v739
      %v756 = vmul.f32 %v683, %v740
      %v757 = vmul.f32 %v685, %v741
      %v758 = vmul.f32 %v687, %v742
      %v759 = vmul.f32 %v689, %v743
      %v760 = vmul.f32 %v691, %v744
      %v761 = vmul.f32 %v693, %v745
      %v762 = vmul.f32 %v695, %v746
      %v763 = vmul.f32 %v697, %v747
      %v764 = vmul.f32 %v699, %v748
      %v765 = vmul.f32 %v701, %v749
      %766 = vst [vmem:[%s226] sm:$0xff] %v750
      %767 = vst [vmem:[%s226 + $0x8] sm:$0xff] %v751
      %768 = vst [vmem:[%s226 + $0x10] sm:$0xff] %v752
      %769 = vst [vmem:[%s226 + $0x18] sm:$0xff] %v753
      %770 = vst [vmem:[%s226 + $0x20] sm:$0xff] %v754
      %771 = vst [vmem:[%s226 + $0x28] sm:$0xff] %v755
      %772 = vst [vmem:[%s226 + $0x30] sm:$0xff] %v756
      %773 = vst [vmem:[%s226 + $0x38] sm:$0xff] %v757
      %774 = vst [vmem:[%s226 + $0x40] sm:$0xff] %v758
      %775 = vst [vmem:[%s226 + $0x48] sm:$0xff] %v759
      %776 = vst [vmem:[%s226 + $0x50] sm:$0xff] %v760
      %777 = vst [vmem:[%s226 + $0x58] sm:$0xff] %v761
      %778 = vst [vmem:[%s226 + $0x60] sm:$0xff] %v762
      %779 = vst [vmem:[%s226 + $0x68] sm:$0xff] %v763
      %780 = vst [vmem:[%s226 + $0x70] sm:$0xff] %v764
      %781 = vst [vmem:[%s226 + $0x78] sm:$0xff] %v765
      %s782 = smul.u32 16, %s16
      %p783 = scmp.lt.s32.totalorder %s782, 31
      %s784 = scalar_select %p783, %s782, 31
      %s785 = smul.addr %s784, 8
      %s786 = scalar_lea.vmem %s5, %s785
      // Predicated region
      $region41: #{mlp_discrete_policy.1} parent=39 // pred_check
        %p787 = pneg %p144
      $region42: #{mlp_discrete_policy.1} parent=39 // pred_check_branch
        %789 = sbr.rel (%p787) target = $region44
      $region43: #{mlp_discrete_policy.1} parent=39 // pred_region
        %s790 = smul.u32 16, %s16
      $region44: #{mlp_discrete_policy.1} parent=39 // pred_fallthru
        _
    $region40: #{mlp_discrete_policy.1} parent=5 // pred_fallthru
      _
    %p791 = scmp.le.s32.totalorder 2, %s11
    // Predicated region
    $region45: #{mlp_discrete_policy.1} parent=5 // pred_check
      %p792 = pneg %p791
    $region46: #{mlp_discrete_policy.1} parent=5 // pred_check_branch
      %794 = sbr.rel (%p792) target = $region48
    $region47: #{mlp_discrete_policy.1} parent=5 // pred_region
      %s795 = ssub.s32 %s11, 2
      // Predicated region
      $region49: #{mlp_discrete_policy.1} parent=47 // pred_check
        %p796 = pneg %p150
      $region50: #{mlp_discrete_policy.1} parent=47 // pred_check_branch
        %798 = sbr.rel (%p796) target = $region52
      $region51: #{mlp_discrete_policy.1} parent=47 // pred_region
        %s799 = smul.u32 16, %s17
        %p800 = scmp.lt.s32.totalorder %s799, 31
        %s801 = scalar_select %p800, %s799, 31
        %s802 = smul.addr %s801, 8
        %s803 = scalar_lea.vmem %s5, %s802
      $region52: #{mlp_discrete_policy.1} parent=47 // pred_fallthru
        _
    $region48: #{mlp_discrete_policy.1} parent=5 // pred_fallthru
      _
  $region6: #{mlp_discrete_policy.1} parent=0 // loop_footer
    %s15 = sadd.s32 1, %s11
  $region7: #{mlp_discrete_policy.1} parent=0 // loop_footer_branch
    %10 = sbr.rel target = $region3
  $region8: #{mlp_discrete_policy.1} parent=0 // loop_exit
    _

</llo_original>
